<compile_context>
chip_gen: v7x
topology: tpu7x:2x2x1
jax: 0.10.0
libtpu: 0.0.40
codegen_flags: <defaults>
</compile_context>

<pallas_src>
import jax
import jax.numpy as jnp
from jax.experimental import pallas as pl
from jax.experimental.pallas import tpu as pltpu


def _round_up(x, m):
    return ((x + m - 1) // m) * m


def _choose_tm(batch, tm_max=1024):
    """Batch-tile size: big tiles for large B, no huge padding for tiny B,
    and an even number (>=2) of tiles when possible for v7x's two cores."""
    b8 = _round_up(max(batch, 8), 8)
    if b8 <= 16:
        return b8                      # tiny batch: one tile, minimal padding
    n_pairs = pl.cdiv(b8, 2 * tm_max)  # how many pairs of <=tm_max tiles
    return _round_up(pl.cdiv(b8, 2 * n_pairs), 8)


def nav_controller_kernel(
    x_ref,                              # (TM, IN_PACK)  bf16  [rf | terrain | 0]
    w_in_ref, b1_ref,                   # fused x-matmul weight / layer-1 bias
    w2_ref, b2_ref, w3_ref, b3_ref,     # rest of RF encoder
    w4a_ref, b4_ref, w5_ref, b5_ref,    # navigator hidden layers
    w6_ref, b6_ref,                     # navigator output layer
    out_ref,                            # (TM, OUT_PACK) bf16  [emb | nav | 0]
):
    x = x_ref[...]                                               # (TM, IN) bf16

    # Fused first matmul: one pass over x yields both the RF-encoder layer-1
    # pre-activation (cols [0,h1p)) and the terrain contribution to the
    # navigator's first layer (cols [h1p, h1p+n1)).  h1p is a multiple of 128
    # so the value slice is lane-aligned.
    h1p = w2_ref.shape[0]
    h_all = jnp.dot(x, w_in_ref[...], preferred_element_type=jnp.float32)
    h = jnp.maximum(h_all[:, :h1p] + b1_ref[...], 0.0)
    terr4 = h_all[:, h1p:]

    # ---- RF encoder (remaining layers) ----
    h = jnp.dot(h.astype(jnp.bfloat16), w2_ref[...],
                preferred_element_type=jnp.float32) + b2_ref[...]
    h = jnp.maximum(h, 0.0)
    # w3/b3 are zero-padded to OUT_PACK columns: emb lands in cols [0, latent).
    emb = jnp.dot(h.astype(jnp.bfloat16), w3_ref[...],
                  preferred_element_type=jnp.float32) + b3_ref[...]

    # ---- Navigator ----
    # concat(emb, terrain) @ W4 == emb_slab @ w4a_pad + terrain-part (terr4);
    # padded rows of w4a and padded cols of the emb slab are zero.
    h2 = (jnp.dot(emb.astype(jnp.bfloat16), w4a_ref[...],
                  preferred_element_type=jnp.float32)
          + terr4 + b4_ref[...])
    h2 = jnp.maximum(h2, 0.0)
    h2 = jnp.dot(h2.astype(jnp.bfloat16), w5_ref[...],
                 preferred_element_type=jnp.float32) + b5_ref[...]
    h2 = jnp.maximum(h2, 0.0)
    # w6/b6 are zero-padded so nav lands in cols [latent, latent+out).
    nav = jnp.dot(h2.astype(jnp.bfloat16), w6_ref[...],
                  preferred_element_type=jnp.float32) + b6_ref[...]

    # emb is zero outside [0,latent), nav is zero outside [latent,latent+out):
    # their sum is the merged [emb | nav | 0] slab -> one lane-dense bf16 vst.
    out_ref[...] = (emb + nav).astype(out_ref.dtype)


def prepare_packed_params(params, rf_dim, terrain_dim):
    """Zero-pad / bf16-cast logical params into the kernel's packed layout."""
    f32, bf16 = jnp.float32, jnp.bfloat16

    h1 = params["w1"].shape[1]          # 64
    h1p = _round_up(h1, 128)            # 128 (lane-aligned slice boundary)
    h2 = params["w2"].shape[1]          # 128
    latent = params["w3"].shape[1]      # 32
    n1 = params["w4a"].shape[1]         # 128
    n2 = params["w5"].shape[1]          # 64
    out = params["w6"].shape[1]         # 2

    in_pack = _round_up(rf_dim + terrain_dim, 32)     # 32 packed input lanes
    out_pack = _round_up(latent + out, 128)           # 128-wide output slab

    # Fused first-layer weight: [ w1 -> cols [0,h1p) | w4b -> cols [h1p,h1p+n1) ]
    w_in = jnp.zeros((in_pack, h1p + n1), f32)
    w_in = w_in.at[:rf_dim, :h1].set(params["w1"])
    w_in = w_in.at[rf_dim:rf_dim + terrain_dim, h1p:].set(params["w4b"])

    b1p = jnp.zeros((1, h1p), f32).at[:, :h1].set(params["b1"])
    # w2 consumes the h1p-wide (zero-padded) hidden; rows >= h1 are zero.
    w2p = jnp.zeros((h1p, h2), f32).at[:h1].set(params["w2"])

    # emb placed in cols [0, latent) of the merged output slab.
    w3p = jnp.zeros((h2, out_pack), f32).at[:, :latent].set(params["w3"])
    b3p = jnp.zeros((1, out_pack), f32).at[:, :latent].set(params["b3"])
    # w4a consumes the out_pack-wide emb slab; rows >= latent are zero.
    w4ap = jnp.zeros((out_pack, n1), f32).at[:latent].set(params["w4a"])
    # nav placed in cols [latent, latent+out) of the merged output slab.
    w6p = jnp.zeros((n2, out_pack), f32).at[:, latent:latent + out].set(params["w6"])
    b6p = jnp.zeros((1, out_pack), f32).at[:, latent:latent + out].set(params["b6"])

    packed = {
        "w_in": w_in.astype(bf16), "b1": b1p,
        "w2": w2p.astype(bf16), "b2": params["b2"],
        "w3": w3p.astype(bf16), "b3": b3p,
        "w4a": w4ap.astype(bf16), "b4": params["b4"],
        "w5": params["w5"].astype(bf16), "b5": params["b5"],
        "w6": w6p.astype(bf16), "b6": b6p,
    }
    return packed, in_pack, out_pack


def navigation_controller_forward(rf_signal, terrain_features, params, *, tm_max=1024):
    """Full NavigationController forward pass in one batch-tiled Pallas kernel."""
    B, rf_dim = rf_signal.shape
    terrain_dim = terrain_features.shape[1]
    latent_dim = params["w3"].shape[1]
    output_dim = params["w6"].shape[1]

    packed, in_pack, out_pack = prepare_packed_params(params, rf_dim, terrain_dim)

    tm = _choose_tm(B, tm_max)
    num_tiles = pl.cdiv(B, tm)
    b_pad = num_tiles * tm

    # Pack rf + terrain into one zero-padded 32-lane bf16 slab.
    x = jnp.zeros((b_pad, in_pack), jnp.bfloat16)
    x = x.at[:B, :rf_dim].set(rf_signal.astype(jnp.bfloat16))
    x = x.at[:B, rf_dim:rf_dim + terrain_dim].set(
        terrain_features.astype(jnp.bfloat16))

    weight_keys = ["w_in", "b1", "w2", "b2", "w3", "b3",
                   "w4a", "b4", "w5", "b5", "w6", "b6"]
    weight_args = [packed[k] for k in weight_keys]

    act_spec = pl.BlockSpec((tm, in_pack), lambda i: (i, 0))
    # Weights/biases: full-array block, constant index_map -> the pipelined
    # VMEM copy is re-used across grid steps (block index never changes).
    weight_specs = [
        pl.BlockSpec(tuple(int(d) for d in w.shape), lambda i: (0, 0))
        for w in weight_args
    ]
    out_spec = pl.BlockSpec((tm, out_pack), lambda i: (i, 0))

    mm_keys = ["w_in", "w2", "w3", "w4a", "w5", "w6"]
    flops = 2 * b_pad * sum(
        int(packed[k].shape[0]) * int(packed[k].shape[1]) for k in mm_keys)
    bytes_accessed = (
        int(x.size) * x.dtype.itemsize
        + sum(int(v.size) * v.dtype.itemsize for v in weight_args)
        + b_pad * out_pack * 2)                       # bf16 merged output slab

    out = pl.pallas_call(
        nav_controller_kernel,
        out_shape=jax.ShapeDtypeStruct((b_pad, out_pack), jnp.bfloat16),
        grid_spec=pltpu.PrefetchScalarGridSpec(
            num_scalar_prefetch=0,
            grid=(num_tiles,),
            in_specs=[act_spec] + weight_specs,
            out_specs=out_spec,
        ),
        compiler_params=pltpu.CompilerParams(
            dimension_semantics=("parallel",),
            vmem_limit_bytes=32 * 1024 * 1024,
        ),
        cost_estimate=pl.CostEstimate(
            flops=flops, transcendentals=0, bytes_accessed=bytes_accessed),
    )(x, *weight_args)

    out = out[:B].astype(jnp.float32)
    nav_commands = out[:, latent_dim:latent_dim + output_dim]
    rf_embedding = out[:, :latent_dim]
    return nav_commands, rf_embedding


def init_params(key, rf_input_dim, terrain_dim,
                rf_hidden_dims=(64, 128), rf_latent_dim=32,
                nav_hidden_dims=(128, 64), output_dim=2):
    """Deterministic synthetic init. Weights are [in, out], biases [1, out]."""
    keys = jax.random.split(key, 12)
    ki = iter(range(12))

    def linear(kw, kb, fan_in, fan_out):
        scale = 1.0 / jnp.sqrt(jnp.float32(fan_in))
        w = jax.random.normal(kw, (fan_in, fan_out), jnp.float32) * scale
        b = jax.random.normal(kb, (1, fan_out), jnp.float32) * scale
        return w, b

    h1, h2 = rf_hidden_dims
    n1, n2 = nav_hidden_dims

    w1, b1 = linear(keys[next(ki)], keys[next(ki)], rf_input_dim, h1)
    w2, b2 = linear(keys[next(ki)], keys[next(ki)], h1, h2)
    w3, b3 = linear(keys[next(ki)], keys[next(ki)], h2, rf_latent_dim)

    # First navigator layer operates on concat([emb, terrain]); split its weight.
    w4_full, b4 = linear(keys[next(ki)], keys[next(ki)],
                         rf_latent_dim + terrain_dim, n1)
    w4a = w4_full[:rf_latent_dim]
    w4b = w4_full[rf_latent_dim:]

    w5, b5 = linear(keys[next(ki)], keys[next(ki)], n1, n2)
    w6, b6 = linear(keys[next(ki)], keys[next(ki)], n2, output_dim)

    return {
        "w1": w1, "b1": b1, "w2": w2, "b2": b2, "w3": w3, "b3": b3,
        "w4a": w4a, "w4b": w4b, "b4": b4,
        "w5": w5, "b5": b5, "w6": w6, "b6": b6,
    }


def reference_forward(rf_signal, terrain_features, params):
    """Pure-JAX reference matching the PyTorch module (eval mode), with the
    same bf16 matmul-operand casts / f32 accumulation as the kernel."""
    def mm(a, w):
        return jnp.dot(a.astype(jnp.bfloat16), w.astype(jnp.bfloat16),
                       preferred_element_type=jnp.float32)

    h = jnp.maximum(mm(rf_signal, params["w1"]) + params["b1"], 0.0)
    h = jnp.maximum(mm(h, params["w2"]) + params["b2"], 0.0)
    emb = mm(h, params["w3"]) + params["b3"]
    x = jnp.concatenate([emb, terrain_features], axis=1)
    w4 = jnp.concatenate([params["w4a"], params["w4b"]], axis=0)
    h2 = jnp.maximum(mm(x, w4) + params["b4"], 0.0)
    h2 = jnp.maximum(mm(h2, params["w5"]) + params["b5"], 0.0)
    nav = mm(h2, params["w6"]) + params["b6"]
    return nav, emb


if __name__ == "__main__":
    key = jax.random.PRNGKey(0)
    k_params, k_rf, k_terr = jax.random.split(key, 3)

    rf_input_dim = 16
    terrain_dim = 8
    params = init_params(k_params, rf_input_dim, terrain_dim)

    ok = True
    # Small example batch (one tiny tile) + a slightly larger one that
    # exercises the multi-tile / row-padding path.
    for batch in (8, 40):
        k_rf, k_terr, k_rf2, k_terr2 = jax.random.split(jax.random.fold_in(key, batch), 4)
        rf_signal = jax.random.normal(k_rf, (batch, rf_input_dim), jnp.float32)
        terrain_features = jax.random.normal(k_terr, (batch, terrain_dim), jnp.float32)

        nav_commands, rf_embedding = navigation_controller_forward(
            rf_signal, terrain_features, params)
        jax.block_until_ready((nav_commands, rf_embedding))

        nav_ref, emb_ref = reference_forward(rf_signal, terrain_features, params)
        ok &= nav_commands.shape == (batch, 2)
        ok &= rf_embedding.shape == (batch, 32)
        ok &= bool(jnp.allclose(nav_commands, nav_ref, atol=2e-2, rtol=2e-2))
        ok &= bool(jnp.allclose(rf_embedding, emb_ref, atol=2e-2, rtol=2e-2))

    assert ok
    print("KERNEL_OK")
</pallas_src>

<mosaic_0001>
module attributes {stable_mosaic.version = 11 : i64} {
  func.func @nav_controller_kernel(%arg0: i32, %arg1: memref<8x32xbf16, #tpu.memory_space<vmem>>, %arg2: memref<32x256xbf16, #tpu.memory_space<vmem>>, %arg3: memref<1x128xf32, #tpu.memory_space<vmem>>, %arg4: memref<128x128xbf16, #tpu.memory_space<vmem>>, %arg5: memref<1x128xf32, #tpu.memory_space<vmem>>, %arg6: memref<128x128xbf16, #tpu.memory_space<vmem>>, %arg7: memref<1x128xf32, #tpu.memory_space<vmem>>, %arg8: memref<128x128xbf16, #tpu.memory_space<vmem>>, %arg9: memref<1x128xf32, #tpu.memory_space<vmem>>, %arg10: memref<128x64xbf16, #tpu.memory_space<vmem>>, %arg11: memref<1x64xf32, #tpu.memory_space<vmem>>, %arg12: memref<64x128xbf16, #tpu.memory_space<vmem>>, %arg13: memref<1x128xf32, #tpu.memory_space<vmem>>, %arg14: memref<8x128xbf16, #tpu.memory_space<vmem>>) attributes {dimension_semantics = [#tpu.dimension_semantics<parallel>], iteration_bounds = array<i64: 1>, scalar_prefetch = 0 : i64, scratch_operands = 0 : i64, tpu.core_type = #tpu.core_type<tc>, window_params = [{transform_indices = @transform_0, window_bounds = array<i64: 8, 32>}, {pipeline_mode = #tpu.pipeline_mode<synchronous>, transform_indices = @transform_1, window_bounds = array<i64: 32, 256>}, {pipeline_mode = #tpu.pipeline_mode<synchronous>, transform_indices = @transform_2, window_bounds = array<i64: 1, 128>}, {pipeline_mode = #tpu.pipeline_mode<synchronous>, transform_indices = @transform_3, window_bounds = array<i64: 128, 128>}, {pipeline_mode = #tpu.pipeline_mode<synchronous>, transform_indices = @transform_4, window_bounds = array<i64: 1, 128>}, {pipeline_mode = #tpu.pipeline_mode<synchronous>, transform_indices = @transform_5, window_bounds = array<i64: 128, 128>}, {pipeline_mode = #tpu.pipeline_mode<synchronous>, transform_indices = @transform_6, window_bounds = array<i64: 1, 128>}, {pipeline_mode = #tpu.pipeline_mode<synchronous>, transform_indices = @transform_7, window_bounds = array<i64: 128, 128>}, {pipeline_mode = #tpu.pipeline_mode<synchronous>, transform_indices = @transform_8, window_bounds = array<i64: 1, 128>}, {pipeline_mode = #tpu.pipeline_mode<synchronous>, transform_indices = @transform_9, window_bounds = array<i64: 128, 64>}, {pipeline_mode = #tpu.pipeline_mode<synchronous>, transform_indices = @transform_10, window_bounds = array<i64: 1, 64>}, {pipeline_mode = #tpu.pipeline_mode<synchronous>, transform_indices = @transform_11, window_bounds = array<i64: 64, 128>}, {pipeline_mode = #tpu.pipeline_mode<synchronous>, transform_indices = @transform_12, window_bounds = array<i64: 1, 128>}, {transform_indices = @transform_13, window_bounds = array<i64: 8, 128>}]} {
    %c0 = arith.constant 0 : index
    %c0_0 = arith.constant 0 : index
    %0 = vector.load %arg1[%c0, %c0_0] : memref<8x32xbf16, #tpu.memory_space<vmem>>, vector<8x32xbf16>
    %c0_1 = arith.constant 0 : index
    %c0_2 = arith.constant 0 : index
    %1 = vector.load %arg2[%c0_1, %c0_2] : memref<32x256xbf16, #tpu.memory_space<vmem>>, vector<32x256xbf16>
    %cst = arith.constant dense<0.000000e+00> : vector<8x256xf32>
    %2 = tpu.matmul %0, %1, %cst {dimension_numbers = #tpu.dot_dimension_numbers<[1], [0], [0], [1], [0, 0, 1, 1], [], []>} : vector<8x32xbf16>, vector<32x256xbf16>, vector<8x256xf32> -> vector<8x256xf32>
    %3 = vector.extract_strided_slice %2 {offsets = [0, 0], sizes = [8, 128], strides = [1, 1]} : vector<8x256xf32> to vector<8x128xf32>
    %c0_3 = arith.constant 0 : index
    %c0_4 = arith.constant 0 : index
    %4 = vector.load %arg3[%c0_3, %c0_4] : memref<1x128xf32, #tpu.memory_space<vmem>>, vector<1x128xf32>
    %5 = vector.broadcast %4 : vector<1x128xf32> to vector<8x128xf32>
    %6 = arith.addf %3, %5 : vector<8x128xf32>
    %cst_5 = arith.constant 0.000000e+00 : f32
    %7 = vector.broadcast %cst_5 : f32 to vector<8x128xf32>
    %8 = arith.maximumf %6, %7 : vector<8x128xf32>
    %9 = vector.extract_strided_slice %2 {offsets = [0, 128], sizes = [8, 128], strides = [1, 1]} : vector<8x256xf32> to vector<8x128xf32>
    %10 = arith.truncf %8 : vector<8x128xf32> to vector<8x128xbf16>
    %c0_6 = arith.constant 0 : index
    %c0_7 = arith.constant 0 : index
    %11 = vector.load %arg4[%c0_6, %c0_7] : memref<128x128xbf16, #tpu.memory_space<vmem>>, vector<128x128xbf16>
    %cst_8 = arith.constant dense<0.000000e+00> : vector<8x128xf32>
    %12 = tpu.matmul %10, %11, %cst_8 {dimension_numbers = #tpu.dot_dimension_numbers<[1], [0], [0], [1], [0, 0, 1, 1], [], []>} : vector<8x128xbf16>, vector<128x128xbf16>, vector<8x128xf32> -> vector<8x128xf32>
    %c0_9 = arith.constant 0 : index
    %c0_10 = arith.constant 0 : index
    %13 = vector.load %arg5[%c0_9, %c0_10] : memref<1x128xf32, #tpu.memory_space<vmem>>, vector<1x128xf32>
    %14 = vector.broadcast %13 : vector<1x128xf32> to vector<8x128xf32>
    %15 = arith.addf %12, %14 : vector<8x128xf32>
    %cst_11 = arith.constant 0.000000e+00 : f32
    %16 = vector.broadcast %cst_11 : f32 to vector<8x128xf32>
    %17 = arith.maximumf %15, %16 : vector<8x128xf32>
    %18 = arith.truncf %17 : vector<8x128xf32> to vector<8x128xbf16>
    %c0_12 = arith.constant 0 : index
    %c0_13 = arith.constant 0 : index
    %19 = vector.load %arg6[%c0_12, %c0_13] : memref<128x128xbf16, #tpu.memory_space<vmem>>, vector<128x128xbf16>
    %cst_14 = arith.constant dense<0.000000e+00> : vector<8x128xf32>
    %20 = tpu.matmul %18, %19, %cst_14 {dimension_numbers = #tpu.dot_dimension_numbers<[1], [0], [0], [1], [0, 0, 1, 1], [], []>} : vector<8x128xbf16>, vector<128x128xbf16>, vector<8x128xf32> -> vector<8x128xf32>
    %c0_15 = arith.constant 0 : index
    %c0_16 = arith.constant 0 : index
    %21 = vector.load %arg7[%c0_15, %c0_16] : memref<1x128xf32, #tpu.memory_space<vmem>>, vector<1x128xf32>
    %22 = vector.broadcast %21 : vector<1x128xf32> to vector<8x128xf32>
    %23 = arith.addf %20, %22 : vector<8x128xf32>
    %24 = arith.truncf %23 : vector<8x128xf32> to vector<8x128xbf16>
    %c0_17 = arith.constant 0 : index
    %c0_18 = arith.constant 0 : index
    %25 = vector.load %arg8[%c0_17, %c0_18] : memref<128x128xbf16, #tpu.memory_space<vmem>>, vector<128x128xbf16>
    %cst_19 = arith.constant dense<0.000000e+00> : vector<8x128xf32>
    %26 = tpu.matmul %24, %25, %cst_19 {dimension_numbers = #tpu.dot_dimension_numbers<[1], [0], [0], [1], [0, 0, 1, 1], [], []>} : vector<8x128xbf16>, vector<128x128xbf16>, vector<8x128xf32> -> vector<8x128xf32>
    %27 = arith.addf %26, %9 : vector<8x128xf32>
    %c0_20 = arith.constant 0 : index
    %c0_21 = arith.constant 0 : index
    %28 = vector.load %arg9[%c0_20, %c0_21] : memref<1x128xf32, #tpu.memory_space<vmem>>, vector<1x128xf32>
    %29 = vector.broadcast %28 : vector<1x128xf32> to vector<8x128xf32>
    %30 = arith.addf %27, %29 : vector<8x128xf32>
    %cst_22 = arith.constant 0.000000e+00 : f32
    %31 = vector.broadcast %cst_22 : f32 to vector<8x128xf32>
    %32 = arith.maximumf %30, %31 : vector<8x128xf32>
    %33 = arith.truncf %32 : vector<8x128xf32> to vector<8x128xbf16>
    %c0_23 = arith.constant 0 : index
    %c0_24 = arith.constant 0 : index
    %34 = vector.load %arg10[%c0_23, %c0_24] : memref<128x64xbf16, #tpu.memory_space<vmem>>, vector<128x64xbf16>
    %cst_25 = arith.constant dense<0.000000e+00> : vector<8x64xf32>
    %35 = tpu.matmul %33, %34, %cst_25 {dimension_numbers = #tpu.dot_dimension_numbers<[1], [0], [0], [1], [0, 0, 1, 1], [], []>} : vector<8x128xbf16>, vector<128x64xbf16>, vector<8x64xf32> -> vector<8x64xf32>
    %c0_26 = arith.constant 0 : index
    %c0_27 = arith.constant 0 : index
    %36 = vector.load %arg11[%c0_26, %c0_27] : memref<1x64xf32, #tpu.memory_space<vmem>>, vector<1x64xf32>
    %37 = vector.broadcast %36 : vector<1x64xf32> to vector<8x64xf32>
    %38 = arith.addf %35, %37 : vector<8x64xf32>
    %cst_28 = arith.constant 0.000000e+00 : f32
    %39 = vector.broadcast %cst_28 : f32 to vector<8x64xf32>
    %40 = arith.maximumf %38, %39 : vector<8x64xf32>
    %41 = arith.truncf %40 : vector<8x64xf32> to vector<8x64xbf16>
    %c0_29 = arith.constant 0 : index
    %c0_30 = arith.constant 0 : index
    %42 = vector.load %arg12[%c0_29, %c0_30] : memref<64x128xbf16, #tpu.memory_space<vmem>>, vector<64x128xbf16>
    %cst_31 = arith.constant dense<0.000000e+00> : vector<8x128xf32>
    %43 = tpu.matmul %41, %42, %cst_31 {dimension_numbers = #tpu.dot_dimension_numbers<[1], [0], [0], [1], [0, 0, 1, 1], [], []>} : vector<8x64xbf16>, vector<64x128xbf16>, vector<8x128xf32> -> vector<8x128xf32>
    %c0_32 = arith.constant 0 : index
    %c0_33 = arith.constant 0 : index
    %44 = vector.load %arg13[%c0_32, %c0_33] : memref<1x128xf32, #tpu.memory_space<vmem>>, vector<1x128xf32>
    %45 = vector.broadcast %44 : vector<1x128xf32> to vector<8x128xf32>
    %46 = arith.addf %43, %45 : vector<8x128xf32>
    %47 = arith.addf %23, %46 : vector<8x128xf32>
    %48 = arith.truncf %47 : vector<8x128xf32> to vector<8x128xbf16>
    %c0_34 = arith.constant 0 : index
    %c0_35 = arith.constant 0 : index
    %49 = vector.load %arg14[%c0_34, %c0_35] : memref<8x128xbf16, #tpu.memory_space<vmem>>, vector<8x128xbf16>
    tpu.vector_store %arg14[%c0_34, %c0_35], %48 {strides = array<i32>} : memref<8x128xbf16, #tpu.memory_space<vmem>>, vector<8x128xbf16>,
    return
  }
  func.func @transform_0(%arg0: i32) -> (i32, i32) {
    %c0_i32 = arith.constant 0 : i32
    %c0_i32_0 = arith.constant 0 : i32
    return %arg0, %c0_i32 : i32, i32
  }
  func.func @transform_1(%arg0: i32) -> (i32, i32) {
    %c0_i32 = arith.constant 0 : i32
    %c0_i32_0 = arith.constant 0 : i32
    %c0_i32_1 = arith.constant 0 : i32
    return %c0_i32, %c0_i32_0 : i32, i32
  }
  func.func @transform_2(%arg0: i32) -> (i32, i32) {
    %c0_i32 = arith.constant 0 : i32
    %c0_i32_0 = arith.constant 0 : i32
    %c0_i32_1 = arith.constant 0 : i32
    return %c0_i32, %c0_i32_0 : i32, i32
  }
  func.func @transform_3(%arg0: i32) -> (i32, i32) {
    %c0_i32 = arith.constant 0 : i32
    %c0_i32_0 = arith.constant 0 : i32
    %c0_i32_1 = arith.constant 0 : i32
    return %c0_i32, %c0_i32_0 : i32, i32
  }
  func.func @transform_4(%arg0: i32) -> (i32, i32) {
    %c0_i32 = arith.constant 0 : i32
    %c0_i32_0 = arith.constant 0 : i32
    %c0_i32_1 = arith.constant 0 : i32
    return %c0_i32, %c0_i32_0 : i32, i32
  }
  func.func @transform_5(%arg0: i32) -> (i32, i32) {
    %c0_i32 = arith.constant 0 : i32
    %c0_i32_0 = arith.constant 0 : i32
    %c0_i32_1 = arith.constant 0 : i32
    return %c0_i32, %c0_i32_0 : i32, i32
  }
  func.func @transform_6(%arg0: i32) -> (i32, i32) {
    %c0_i32 = arith.constant 0 : i32
    %c0_i32_0 = arith.constant 0 : i32
    %c0_i32_1 = arith.constant 0 : i32
    return %c0_i32, %c0_i32_0 : i32, i32
  }
  func.func @transform_7(%arg0: i32) -> (i32, i32) {
    %c0_i32 = arith.constant 0 : i32
    %c0_i32_0 = arith.constant 0 : i32
    %c0_i32_1 = arith.constant 0 : i32
    return %c0_i32, %c0_i32_0 : i32, i32
  }
  func.func @transform_8(%arg0: i32) -> (i32, i32) {
    %c0_i32 = arith.constant 0 : i32
    %c0_i32_0 = arith.constant 0 : i32
    %c0_i32_1 = arith.constant 0 : i32
    return %c0_i32, %c0_i32_0 : i32, i32
  }
  func.func @transform_9(%arg0: i32) -> (i32, i32) {
    %c0_i32 = arith.constant 0 : i32
    %c0_i32_0 = arith.constant 0 : i32
    %c0_i32_1 = arith.constant 0 : i32
    return %c0_i32, %c0_i32_0 : i32, i32
  }
  func.func @transform_10(%arg0: i32) -> (i32, i32) {
    %c0_i32 = arith.constant 0 : i32
    %c0_i32_0 = arith.constant 0 : i32
    %c0_i32_1 = arith.constant 0 : i32
    return %c0_i32, %c0_i32_0 : i32, i32
  }
  func.func @transform_11(%arg0: i32) -> (i32, i32) {
    %c0_i32 = arith.constant 0 : i32
    %c0_i32_0 = arith.constant 0 : i32
    %c0_i32_1 = arith.constant 0 : i32
    return %c0_i32, %c0_i32_0 : i32, i32
  }
  func.func @transform_12(%arg0: i32) -> (i32, i32) {
    %c0_i32 = arith.constant 0 : i32
    %c0_i32_0 = arith.constant 0 : i32
    %c0_i32_1 = arith.constant 0 : i32
    return %c0_i32, %c0_i32_0 : i32, i32
  }
  func.func @transform_13(%arg0: i32) -> (i32, i32) {
    %c0_i32 = arith.constant 0 : i32
    %c0_i32_0 = arith.constant 0 : i32
    return %arg0, %c0_i32 : i32, i32
  }
}

</mosaic_0001>

<llo_original>
// kernel: tpu_custom_call.1
$region0: #{tpu_custom_call.1}
  #allocation0 [shape = 'u32[]', space=smem, size = 0x4, offset = 0x4, fixed_abs, tag = 'smem constant byte address 0x4 - core index']
  #allocation1 [shape = 'u32[144,128]{1,0:T(1,128)}', space=vmem, size = 0x12000, scoped, tag = 'internal scratch']
  %s0 = inlined_call_operand.hbm [shape: bf16[8,32], index: 0, kind: input, shape index: {}]
  %s1 = inlined_call_operand.vmem [shape: bf16[32,256], index: 1, kind: input, shape index: {}]
  %s2 = inlined_call_operand.vmem [shape: f32[1,128], index: 2, kind: input, shape index: {}]
  %s3 = inlined_call_operand.vmem [shape: bf16[128,128], index: 3, kind: input, shape index: {}]
  %s4 = inlined_call_operand.vmem [shape: f32[1,128], index: 4, kind: input, shape index: {}]
  %s5 = inlined_call_operand.hbm [shape: bf16[128,128], index: 5, kind: input, shape index: {}]
  %s6 = inlined_call_operand.hbm [shape: f32[1,128], index: 6, kind: input, shape index: {}]
  %s7 = inlined_call_operand.hbm [shape: bf16[128,128], index: 7, kind: input, shape index: {}]
  %s8 = inlined_call_operand.hbm [shape: f32[1,128], index: 8, kind: input, shape index: {}]
  %s9 = inlined_call_operand.vmem [shape: bf16[128,64], index: 9, kind: input, shape index: {}]
  %s10 = inlined_call_operand.vmem [shape: f32[1,64], index: 10, kind: input, shape index: {}]
  %s11 = inlined_call_operand.hbm [shape: bf16[64,128], index: 11, kind: input, shape index: {}]
  %s12 = inlined_call_operand.vmem [shape: f32[1,128], index: 12, kind: input, shape index: {}]
  %s13 = inlined_call_operand.hbm [shape: bf16[8,128], index: 13, kind: output, shape index: {}]
  %s14 = sld [smem:[#allocation0]]
  $region86: #{tpu_custom_call.1} parent=0
    _
  %s16 = ssub.s32 1, %s14
  %s17 = scalar_select 0, %s16, %s14
  $region1: #{tpu_custom_call.1} parent=0
    #allocation2 [shape = 'u8[2048]{0}', space=vmem, size = 0x800, scoped, tag = 'input window, operand 0, single buffered']
    #allocation3 [shape = 's32[1]{0}', space=sflag, size = 0x4, scoped, tag = 'scoped memory for tpu_custom_call.1']
    #allocation4 [shape = 's32[1]{0}', space=sflag, size = 0x4, scoped, tag = 'scoped memory for tpu_custom_call.1']
    #allocation5 [shape = 'u8[32768]{0}', space=vmem, size = 0x8000, scoped, tag = 'input window, operand 5, single buffered']
    #allocation6 [shape = 's32[1]{0}', space=sflag, size = 0x4, scoped, tag = 'scoped memory for tpu_custom_call.1']
    #allocation7 [shape = 'u8[512]{0}', space=vmem, size = 0x400, scoped, tag = 'input window, operand 6, single buffered']
    #allocation8 [shape = 'u8[32768]{0}', space=vmem, size = 0x8000, scoped, tag = 'input window, operand 7, single buffered']
    #allocation9 [shape = 's32[1]{0}', space=sflag, size = 0x4, scoped, tag = 'scoped memory for tpu_custom_call.1']
    #allocation10 [shape = 'u8[512]{0}', space=vmem, size = 0x400, scoped, tag = 'input window, operand 8, single buffered']
    #allocation11 [shape = 'u8[16384]{0}', space=vmem, size = 0x4000, scoped, tag = 'input window, operand 11, single buffered']
    #allocation12 [shape = 's32[1]{0}', space=sflag, size = 0x4, scoped, tag = 'scoped memory for tpu_custom_call.1']
    #allocation13 [shape = 'u8[2048]{0}', space=vmem, size = 0x800, scoped, tag = 'output window, operand 0, single buffered']
    %18 = vsyncpa [#allocation3], 0
    %19 = vsyncpa [#allocation6], 0
    %20 = vsyncpa [#allocation9], 0
    %21 = vsyncpa [#allocation12], 0
    %22 = vsyncpa [#allocation4], 0
    // Predicated region
    $region2: #{tpu_custom_call.1} parent=1 // pred_check
      _
    $region3: #{tpu_custom_call.1} parent=1 // pred_check_branch
      %24 = sbr.rel (0) target = $region5
    $region4: #{tpu_custom_call.1} parent=1 // pred_region
      %s26 = ssub.s32 64, 64
      %27 = vsyncadd [#allocation3], %s26
      %s29 = sshll.u32 [#allocation2], 4
      %s30 = int_to_ptr.vmem [resolvable:$true] %s29
      %32 = dma.hbm_to_vmem [thread:$0]  %s0, 64, %s30, [#allocation3]
    $region5: #{tpu_custom_call.1} parent=1 // pred_fallthru
      _
    // Predicated region
    $region6: #{tpu_custom_call.1} parent=1 // pred_check
      _
    $region7: #{tpu_custom_call.1} parent=1 // pred_check_branch
      %34 = sbr.rel (0) target = $region9
    $region8: #{tpu_custom_call.1} parent=1 // pred_region
      _
    $region9: #{tpu_custom_call.1} parent=1 // pred_fallthru
      _
    // Predicated region
    $region10: #{tpu_custom_call.1} parent=1 // pred_check
      _
    $region11: #{tpu_custom_call.1} parent=1 // pred_check_branch
      %36 = sbr.rel (0) target = $region13
    $region12: #{tpu_custom_call.1} parent=1 // pred_region
      _
    $region13: #{tpu_custom_call.1} parent=1 // pred_fallthru
      _
    // Predicated region
    $region14: #{tpu_custom_call.1} parent=1 // pred_check
      _
    $region15: #{tpu_custom_call.1} parent=1 // pred_check_branch
      %38 = sbr.rel (0) target = $region17
    $region16: #{tpu_custom_call.1} parent=1 // pred_region
      _
    $region17: #{tpu_custom_call.1} parent=1 // pred_fallthru
      _
    // Predicated region
    $region18: #{tpu_custom_call.1} parent=1 // pred_check
      _
    $region19: #{tpu_custom_call.1} parent=1 // pred_check_branch
      %40 = sbr.rel (0) target = $region21
    $region20: #{tpu_custom_call.1} parent=1 // pred_region
      _
    $region21: #{tpu_custom_call.1} parent=1 // pred_fallthru
      _
    // Predicated region
    $region22: #{tpu_custom_call.1} parent=1 // pred_check
      _
    $region23: #{tpu_custom_call.1} parent=1 // pred_check_branch
      %42 = sbr.rel (0) target = $region25
    $region24: #{tpu_custom_call.1} parent=1 // pred_region
      %s44 = ssub.s32 1024, 1024
      %45 = vsyncadd [#allocation6], %s44
      %s46 = sshll.u32 [#allocation5], 4
      %s47 = int_to_ptr.vmem [resolvable:$true] %s46
      %52 = dma.hbm_to_vmem [thread:$0]  %s5, 1024, %s47, [#allocation6], 64, 64, 4
    $region25: #{tpu_custom_call.1} parent=1 // pred_fallthru
      _
    // Predicated region
    $region26: #{tpu_custom_call.1} parent=1 // pred_check
      _
    $region27: #{tpu_custom_call.1} parent=1 // pred_check_branch
      %54 = sbr.rel (0) target = $region29
    $region28: #{tpu_custom_call.1} parent=1 // pred_region
      %s56 = ssub.s32 16, 16
      %57 = vsyncadd [#allocation6], %s56
      %s59 = sshll.u32 [#allocation7], 4
      %s60 = int_to_ptr.vmem [resolvable:$true] %s59
      %62 = dma.hbm_to_vmem [thread:$0]  %s6, 16, %s60, [#allocation6]
    $region29: #{tpu_custom_call.1} parent=1 // pred_fallthru
      _
    // Predicated region
    $region30: #{tpu_custom_call.1} parent=1 // pred_check
      _
    $region31: #{tpu_custom_call.1} parent=1 // pred_check_branch
      %64 = sbr.rel (0) target = $region33
    $region32: #{tpu_custom_call.1} parent=1 // pred_region
      %s66 = ssub.s32 1024, 1024
      %67 = vsyncadd [#allocation9], %s66
      %s68 = sshll.u32 [#allocation8], 4
      %s69 = int_to_ptr.vmem [resolvable:$true] %s68
      %74 = dma.hbm_to_vmem [thread:$0]  %s7, 1024, %s69, [#allocation9], 64, 64, 4
    $region33: #{tpu_custom_call.1} parent=1 // pred_fallthru
      _
    // Predicated region
    $region34: #{tpu_custom_call.1} parent=1 // pred_check
      _
    $region35: #{tpu_custom_call.1} parent=1 // pred_check_branch
      %76 = sbr.rel (0) target = $region37
    $region36: #{tpu_custom_call.1} parent=1 // pred_region
      %s78 = ssub.s32 16, 16
      %79 = vsyncadd [#allocation9], %s78
      %s81 = sshll.u32 [#allocation10], 4
      %s82 = int_to_ptr.vmem [resolvable:$true] %s81
      %84 = dma.hbm_to_vmem [thread:$0]  %s8, 16, %s82, [#allocation9]
    $region37: #{tpu_custom_call.1} parent=1 // pred_fallthru
      _
    // Predicated region
    $region38: #{tpu_custom_call.1} parent=1 // pred_check
      _
    $region39: #{tpu_custom_call.1} parent=1 // pred_check_branch
      %86 = sbr.rel (0) target = $region41
    $region40: #{tpu_custom_call.1} parent=1 // pred_region
      _
    $region41: #{tpu_custom_call.1} parent=1 // pred_fallthru
      _
    // Predicated region
    $region42: #{tpu_custom_call.1} parent=1 // pred_check
      _
    $region43: #{tpu_custom_call.1} parent=1 // pred_check_branch
      %88 = sbr.rel (0) target = $region45
    $region44: #{tpu_custom_call.1} parent=1 // pred_region
      _
    $region45: #{tpu_custom_call.1} parent=1 // pred_fallthru
      _
    // Predicated region
    $region46: #{tpu_custom_call.1} parent=1 // pred_check
      _
    $region47: #{tpu_custom_call.1} parent=1 // pred_check_branch
      %90 = sbr.rel (0) target = $region49
    $region48: #{tpu_custom_call.1} parent=1 // pred_region
      %s92 = ssub.s32 512, 512
      %93 = vsyncadd [#allocation12], %s92
      %s94 = sshll.u32 [#allocation11], 4
      %s95 = int_to_ptr.vmem [resolvable:$true] %s94
      %100 = dma.hbm_to_vmem [thread:$0]  %s11, 512, %s95, [#allocation12], 64, 64, 4
    $region49: #{tpu_custom_call.1} parent=1 // pred_fallthru
      _
    // Predicated region
    $region50: #{tpu_custom_call.1} parent=1 // pred_check
      _
    $region51: #{tpu_custom_call.1} parent=1 // pred_check_branch
      %102 = sbr.rel (0) target = $region53
    $region52: #{tpu_custom_call.1} parent=1 // pred_region
      _
    $region53: #{tpu_custom_call.1} parent=1 // pred_fallthru
      _
    // Predicated region
    $region54: #{tpu_custom_call.1} parent=1 // pred_check
      _
    $region55: #{tpu_custom_call.1} parent=1 // pred_check_branch
      %104 = sbr.rel (0) target = $region57
    $region56: #{tpu_custom_call.1} parent=1 // pred_region
      %105 = dma.done [#allocation3], 64
    $region57: #{tpu_custom_call.1} parent=1 // pred_fallthru
      _
    // Predicated region
    $region58: #{tpu_custom_call.1} parent=1 // pred_check
      _
    $region59: #{tpu_custom_call.1} parent=1 // pred_check_branch
      %107 = sbr.rel (0) target = $region61
    $region60: #{tpu_custom_call.1} parent=1 // pred_region
      %108 = dma.done [#allocation6], 1024
    $region61: #{tpu_custom_call.1} parent=1 // pred_fallthru
      _
    // Predicated region
    $region62: #{tpu_custom_call.1} parent=1 // pred_check
      _
    $region63: #{tpu_custom_call.1} parent=1 // pred_check_branch
      %110 = sbr.rel (0) target = $region65
    $region64: #{tpu_custom_call.1} parent=1 // pred_region
      %111 = dma.done [#allocation6], 16
    $region65: #{tpu_custom_call.1} parent=1 // pred_fallthru
      _
    // Predicated region
    $region66: #{tpu_custom_call.1} parent=1 // pred_check
      _
    $region67: #{tpu_custom_call.1} parent=1 // pred_check_branch
      %113 = sbr.rel (0) target = $region69
    $region68: #{tpu_custom_call.1} parent=1 // pred_region
      %114 = dma.done [#allocation9], 1024
    $region69: #{tpu_custom_call.1} parent=1 // pred_fallthru
      _
    // Predicated region
    $region70: #{tpu_custom_call.1} parent=1 // pred_check
      _
    $region71: #{tpu_custom_call.1} parent=1 // pred_check_branch
      %116 = sbr.rel (0) target = $region73
    $region72: #{tpu_custom_call.1} parent=1 // pred_region
      %117 = dma.done [#allocation9], 16
    $region73: #{tpu_custom_call.1} parent=1 // pred_fallthru
      _
    // Predicated region
    $region74: #{tpu_custom_call.1} parent=1 // pred_check
      _
    $region75: #{tpu_custom_call.1} parent=1 // pred_check_branch
      %119 = sbr.rel (0) target = $region77
    $region76: #{tpu_custom_call.1} parent=1 // pred_region
      %120 = dma.done [#allocation12], 512
    $region77: #{tpu_custom_call.1} parent=1 // pred_fallthru
      _
    %v122 = vld [vmem:[#allocation2] sm:$0xf]
    %v123 = vld [vmem:[%s1] sm:$0xff]
    %v124 = vld [vmem:[%s1 + $0x8] sm:$0xff]
    %v125 = vld [vmem:[%s1 + $0x10] sm:$0xff]
    %v126 = vld [vmem:[%s1 + $0x18] sm:$0xff]
    %v131 = vunpack.c.l.b16 %v123
    %v132 = vunpack.c.h.b16 %v123
    %v133 = vunpack.c.l.b16 %v124
    %v134 = vunpack.c.h.b16 %v124
    %v135 = vunpack.c.l.b16 %v125
    %v136 = vunpack.c.h.b16 %v125
    %v137 = vunpack.c.l.b16 %v126
    %v138 = vunpack.c.h.b16 %v126
    %v139 = vpack.c.b16 %v133, %v131
    %v140 = vpack.c.b16 %v134, %v132
    %v141 = vpack.c.b16 %v137, %v135
    %v142 = vpack.c.b16 %v138, %v136
    %vm147 = vcmask 261120
    %v149 = vsel %vm147, %v122, 0
    %151 = vmatprep.subr.bf16.mxu0 %v140
    %152 = vmatpush1.bf16.msra.mxu0 %v139
    %153 = vmatprep.subr.bf16.mxu0 %v142
    %154 = vmatpush1.bf16.msra.mxu0 %v141
    %155 = vmatprep.subr.bf16.mxu0 0
    %156 = vmatpush1.bf16.msra.mxu0 0
    %157 = vmatprep.subr.bf16.mxu0 0
    %158 = vmatpush1.bf16.msra.mxu0 0
    %159 = vmatprep.subr.bf16.mxu0 0
    %160 = vmatpush1.bf16.msra.mxu0 0
    %161 = vmatprep.subr.bf16.mxu0 0
    %162 = vmatpush1.bf16.msra.mxu0 0
    %163 = vmatprep.subr.bf16.mxu0 0
    %164 = vmatpush1.bf16.msra.mxu0 0
    %165 = vmatprep.subr.bf16.mxu0 0
    %166 = vmatpush1.bf16.msra.mxu0 0
    %167 = vmatprep.subr.bf16.mxu0 0
    %168 = vmatpush1.bf16.msra.mxu0 0
    %169 = vmatprep.subr.bf16.mxu0 0
    %170 = vmatpush1.bf16.msra.mxu0 0
    %171 = vmatprep.subr.bf16.mxu0 0
    %172 = vmatpush1.bf16.msra.mxu0 0
    %173 = vmatprep.subr.bf16.mxu0 0
    %174 = vmatpush1.bf16.msra.mxu0 0
    %175 = vmatprep.subr.bf16.mxu0 0
    %176 = vmatpush1.bf16.msra.mxu0 0
    %177 = vmatprep.subr.bf16.mxu0 0
    %178 = vmatpush1.bf16.msra.mxu0 0
    %179 = vmatprep.subr.bf16.mxu0 0
    %180 = vmatpush1.bf16.msra.mxu0 0
    %181 = vmatprep.subr.bf16.mxu0 0
    %182 = vmatpush1.bf16.msra.mxu0 0
    %183 = vmatprep.mubr.bf16.mxu0 0
    %184 = vmatmul.mubr.bf16.gmra.mrb[0].mxu0 %v149
    %v185 = vpop.f32.mrb[0].mxu0
    %v186 = vadd.f32 0.0, %v185
    %v187 = vpop.f32.mrb[0].mxu0
    %v188 = vadd.f32 0.0, %v187
    %v189 = vpop.f32.mrb[0].mxu0
    %v190 = vpop.f32.mrb[0].mxu0
    %191 = vdwg.mxu0
    %v192 = vld [vmem:[%s2] sm:$0x1]
    %v194 = vlaneseq
    %v195 = vshrl.u32 %v194, 7
    %v196 = vsub.s32 0, %v195
    %v197 = vrot.slane %v192, %v196
    %v199 = vadd.f32 %v186, %v197
    %v200 = vmax.f32 %v199, 0.0
    %v201 = vpack.c.bf16 %v200, %v200
    %v202 = vld [vmem:[%s3] sm:$0xf]
    %v203 = vld [vmem:[%s3 + $0x4] sm:$0xf]
    %v204 = vld [vmem:[%s3 + $0x8] sm:$0xf]
    %v205 = vld [vmem:[%s3 + $0xc] sm:$0xf]
    %v206 = vld [vmem:[%s3 + $0x10] sm:$0xf]
    %v207 = vld [vmem:[%s3 + $0x14] sm:$0xf]
    %v208 = vld [vmem:[%s3 + $0x18] sm:$0xf]
    %v209 = vld [vmem:[%s3 + $0x1c] sm:$0xf]
    %v210 = vld [vmem:[%s3 + $0x20] sm:$0xf]
    %v211 = vld [vmem:[%s3 + $0x24] sm:$0xf]
    %v212 = vld [vmem:[%s3 + $0x28] sm:$0xf]
    %v213 = vld [vmem:[%s3 + $0x2c] sm:$0xf]
    %v214 = vld [vmem:[%s3 + $0x30] sm:$0xf]
    %v215 = vld [vmem:[%s3 + $0x34] sm:$0xf]
    %v216 = vld [vmem:[%s3 + $0x38] sm:$0xf]
    %v217 = vld [vmem:[%s3 + $0x3c] sm:$0xf]
    %v218 = vld [vmem:[%s4] sm:$0x1]
    %v220 = vlaneseq
    %v221 = vshrl.u32 %v220, 7
    %v222 = vsub.s32 0, %v221
    %v223 = vrot.slane %v218, %v222
    %v241 = vunpack.c.l.b16 %v202
    %v242 = vunpack.c.l.b16 %v203
    %v243 = vunpack.c.l.b16 %v204
    %v244 = vunpack.c.l.b16 %v205
    %v245 = vunpack.c.l.b16 %v206
    %v246 = vunpack.c.l.b16 %v207
    %v247 = vunpack.c.l.b16 %v208
    %v248 = vunpack.c.l.b16 %v209
    %v249 = vunpack.c.l.b16 %v210
    %v250 = vunpack.c.l.b16 %v211
    %v251 = vunpack.c.l.b16 %v212
    %v252 = vunpack.c.l.b16 %v213
    %v253 = vunpack.c.l.b16 %v214
    %v254 = vunpack.c.l.b16 %v215
    %v255 = vunpack.c.l.b16 %v216
    %v256 = vunpack.c.l.b16 %v217
    %v257 = vpack.c.b16 %v242, %v241
    %v258 = vpack.c.b16 %v244, %v243
    %v259 = vpack.c.b16 %v246, %v245
    %v260 = vpack.c.b16 %v248, %v247
    %v261 = vpack.c.b16 %v250, %v249
    %v262 = vpack.c.b16 %v252, %v251
    %v263 = vpack.c.b16 %v254, %v253
    %v264 = vpack.c.b16 %v256, %v255
    %273 = vmatprep.subr.bf16.mxu0 0
    %274 = vmatpush1.bf16.msra.mxu0 %v257
    %275 = vmatprep.subr.bf16.mxu0 0
    %276 = vmatpush1.bf16.msra.mxu0 %v258
    %277 = vmatprep.subr.bf16.mxu0 0
    %278 = vmatpush1.bf16.msra.mxu0 %v259
    %279 = vmatprep.subr.bf16.mxu0 0
    %280 = vmatpush1.bf16.msra.mxu0 %v260
    %281 = vmatprep.subr.bf16.mxu0 0
    %282 = vmatpush1.bf16.msra.mxu0 %v261
    %283 = vmatprep.subr.bf16.mxu0 0
    %284 = vmatpush1.bf16.msra.mxu0 %v262
    %285 = vmatprep.subr.bf16.mxu0 0
    %286 = vmatpush1.bf16.msra.mxu0 %v263
    %287 = vmatprep.subr.bf16.mxu0 0
    %288 = vmatpush1.bf16.msra.mxu0 %v264
    %289 = vmatprep.subr.bf16.mxu0 0
    %290 = vmatpush1.bf16.msra.mxu0 0
    %291 = vmatprep.subr.bf16.mxu0 0
    %292 = vmatpush1.bf16.msra.mxu0 0
    %293 = vmatprep.subr.bf16.mxu0 0
    %294 = vmatpush1.bf16.msra.mxu0 0
    %295 = vmatprep.subr.bf16.mxu0 0
    %296 = vmatpush1.bf16.msra.mxu0 0
    %297 = vmatprep.subr.bf16.mxu0 0
    %298 = vmatpush1.bf16.msra.mxu0 0
    %299 = vmatprep.subr.bf16.mxu0 0
    %300 = vmatpush1.bf16.msra.mxu0 0
    %301 = vmatprep.subr.bf16.mxu0 0
    %302 = vmatpush1.bf16.msra.mxu0 0
    %303 = vmatprep.subr.bf16.mxu0 0
    %304 = vmatpush1.bf16.msra.mxu0 0
    %305 = vmatprep.mubr.bf16.mxu0 0
    %306 = vmatmul.mubr.bf16.gmra.mrb[0].mxu0 %v201
    %v307 = vpop.f32.mrb[0].mxu0
    %v308 = vadd.f32 %v223, %v307
    %v309 = vpop.f32.mrb[0].mxu0
    %v310 = vpop.f32.mrb[0].mxu0
    %v311 = vpop.f32.mrb[0].mxu0
    %312 = vdwg.mxu0
    %v313 = vmax.f32 %v308, 0.0
    %v314 = vpack.c.bf16 %v313, %v313
    %v315 = vld [vmem:[#allocation5] sm:$0xf]
    %v316 = vld [vmem:[#allocation5 + $0x4] sm:$0xf]
    %v317 = vld [vmem:[#allocation5 + $0x8] sm:$0xf]
    %v318 = vld [vmem:[#allocation5 + $0xc] sm:$0xf]
    %v319 = vld [vmem:[#allocation5 + $0x10] sm:$0xf]
    %v320 = vld [vmem:[#allocation5 + $0x14] sm:$0xf]
    %v321 = vld [vmem:[#allocation5 + $0x18] sm:$0xf]
    %v322 = vld [vmem:[#allocation5 + $0x1c] sm:$0xf]
    %v323 = vld [vmem:[#allocation5 + $0x20] sm:$0xf]
    %v324 = vld [vmem:[#allocation5 + $0x24] sm:$0xf]
    %v325 = vld [vmem:[#allocation5 + $0x28] sm:$0xf]
    %v326 = vld [vmem:[#allocation5 + $0x2c] sm:$0xf]
    %v327 = vld [vmem:[#allocation5 + $0x30] sm:$0xf]
    %v328 = vld [vmem:[#allocation5 + $0x34] sm:$0xf]
    %v329 = vld [vmem:[#allocation5 + $0x38] sm:$0xf]
    %v330 = vld [vmem:[#allocation5 + $0x3c] sm:$0xf]
    %v331 = vld [vmem:[#allocation7] sm:$0x1]
    %v333 = vlaneseq
    %v334 = vshrl.u32 %v333, 7
    %v335 = vsub.s32 0, %v334
    %v336 = vrot.slane %v331, %v335
    %v354 = vunpack.c.l.b16 %v315
    %v355 = vunpack.c.l.b16 %v316
    %v356 = vunpack.c.l.b16 %v317
    %v357 = vunpack.c.l.b16 %v318
    %v358 = vunpack.c.l.b16 %v319
    %v359 = vunpack.c.l.b16 %v320
    %v360 = vunpack.c.l.b16 %v321
    %v361 = vunpack.c.l.b16 %v322
    %v362 = vunpack.c.l.b16 %v323
    %v363 = vunpack.c.l.b16 %v324
    %v364 = vunpack.c.l.b16 %v325
    %v365 = vunpack.c.l.b16 %v326
    %v366 = vunpack.c.l.b16 %v327
    %v367 = vunpack.c.l.b16 %v328
    %v368 = vunpack.c.l.b16 %v329
    %v369 = vunpack.c.l.b16 %v330
    %v370 = vpack.c.b16 %v355, %v354
    %v371 = vpack.c.b16 %v357, %v356
    %v372 = vpack.c.b16 %v359, %v358
    %v373 = vpack.c.b16 %v361, %v360
    %v374 = vpack.c.b16 %v363, %v362
    %v375 = vpack.c.b16 %v365, %v364
    %v376 = vpack.c.b16 %v367, %v366
    %v377 = vpack.c.b16 %v369, %v368
    %386 = vmatprep.subr.bf16.mxu0 0
    %387 = vmatpush1.bf16.msra.mxu0 %v370
    %388 = vmatprep.subr.bf16.mxu0 0
    %389 = vmatpush1.bf16.msra.mxu0 %v371
    %390 = vmatprep.subr.bf16.mxu0 0
    %391 = vmatpush1.bf16.msra.mxu0 %v372
    %392 = vmatprep.subr.bf16.mxu0 0
    %393 = vmatpush1.bf16.msra.mxu0 %v373
    %394 = vmatprep.subr.bf16.mxu0 0
    %395 = vmatpush1.bf16.msra.mxu0 %v374
    %396 = vmatprep.subr.bf16.mxu0 0
    %397 = vmatpush1.bf16.msra.mxu0 %v375
    %398 = vmatprep.subr.bf16.mxu0 0
    %399 = vmatpush1.bf16.msra.mxu0 %v376
    %400 = vmatprep.subr.bf16.mxu0 0
    %401 = vmatpush1.bf16.msra.mxu0 %v377
    %402 = vmatprep.subr.bf16.mxu0 0
    %403 = vmatpush1.bf16.msra.mxu0 0
    %404 = vmatprep.subr.bf16.mxu0 0
    %405 = vmatpush1.bf16.msra.mxu0 0
    %406 = vmatprep.subr.bf16.mxu0 0
    %407 = vmatpush1.bf16.msra.mxu0 0
    %408 = vmatprep.subr.bf16.mxu0 0
    %409 = vmatpush1.bf16.msra.mxu0 0
    %410 = vmatprep.subr.bf16.mxu0 0
    %411 = vmatpush1.bf16.msra.mxu0 0
    %412 = vmatprep.subr.bf16.mxu0 0
    %413 = vmatpush1.bf16.msra.mxu0 0
    %414 = vmatprep.subr.bf16.mxu0 0
    %415 = vmatpush1.bf16.msra.mxu0 0
    %416 = vmatprep.subr.bf16.mxu0 0
    %417 = vmatpush1.bf16.msra.mxu0 0
    %418 = vmatprep.mubr.bf16.mxu0 0
    %419 = vmatmul.mubr.bf16.gmra.mrb[0].mxu0 %v314
    %v420 = vpop.f32.mrb[0].mxu0
    %v421 = vadd.f32 %v336, %v420
    %v422 = vpop.f32.mrb[0].mxu0
    %v423 = vpop.f32.mrb[0].mxu0
    %v424 = vpop.f32.mrb[0].mxu0
    %425 = vdwg.mxu0
    %v426 = vpack.c.bf16 %v421, %v421
    %v427 = vld [vmem:[#allocation8] sm:$0xf]
    %v428 = vld [vmem:[#allocation8 + $0x4] sm:$0xf]
    %v429 = vld [vmem:[#allocation8 + $0x8] sm:$0xf]
    %v430 = vld [vmem:[#allocation8 + $0xc] sm:$0xf]
    %v431 = vld [vmem:[#allocation8 + $0x10] sm:$0xf]
    %v432 = vld [vmem:[#allocation8 + $0x14] sm:$0xf]
    %v433 = vld [vmem:[#allocation8 + $0x18] sm:$0xf]
    %v434 = vld [vmem:[#allocation8 + $0x1c] sm:$0xf]
    %v435 = vld [vmem:[#allocation8 + $0x20] sm:$0xf]
    %v436 = vld [vmem:[#allocation8 + $0x24] sm:$0xf]
    %v437 = vld [vmem:[#allocation8 + $0x28] sm:$0xf]
    %v438 = vld [vmem:[#allocation8 + $0x2c] sm:$0xf]
    %v439 = vld [vmem:[#allocation8 + $0x30] sm:$0xf]
    %v440 = vld [vmem:[#allocation8 + $0x34] sm:$0xf]
    %v441 = vld [vmem:[#allocation8 + $0x38] sm:$0xf]
    %v442 = vld [vmem:[#allocation8 + $0x3c] sm:$0xf]
    %v459 = vunpack.c.l.b16 %v427
    %v460 = vunpack.c.l.b16 %v428
    %v461 = vunpack.c.l.b16 %v429
    %v462 = vunpack.c.l.b16 %v430
    %v463 = vunpack.c.l.b16 %v431
    %v464 = vunpack.c.l.b16 %v432
    %v465 = vunpack.c.l.b16 %v433
    %v466 = vunpack.c.l.b16 %v434
    %v467 = vunpack.c.l.b16 %v435
    %v468 = vunpack.c.l.b16 %v436
    %v469 = vunpack.c.l.b16 %v437
    %v470 = vunpack.c.l.b16 %v438
    %v471 = vunpack.c.l.b16 %v439
    %v472 = vunpack.c.l.b16 %v440
    %v473 = vunpack.c.l.b16 %v441
    %v474 = vunpack.c.l.b16 %v442
    %v475 = vpack.c.b16 %v460, %v459
    %v476 = vpack.c.b16 %v462, %v461
    %v477 = vpack.c.b16 %v464, %v463
    %v478 = vpack.c.b16 %v466, %v465
    %v479 = vpack.c.b16 %v468, %v467
    %v480 = vpack.c.b16 %v470, %v469
    %v481 = vpack.c.b16 %v472, %v471
    %v482 = vpack.c.b16 %v474, %v473
    %491 = vmatprep.subr.bf16.mxu0 0
    %492 = vmatpush1.bf16.msra.mxu0 %v475
    %493 = vmatprep.subr.bf16.mxu0 0
    %494 = vmatpush1.bf16.msra.mxu0 %v476
    %495 = vmatprep.subr.bf16.mxu0 0
    %496 = vmatpush1.bf16.msra.mxu0 %v477
    %497 = vmatprep.subr.bf16.mxu0 0
    %498 = vmatpush1.bf16.msra.mxu0 %v478
    %499 = vmatprep.subr.bf16.mxu0 0
    %500 = vmatpush1.bf16.msra.mxu0 %v479
    %501 = vmatprep.subr.bf16.mxu0 0
    %502 = vmatpush1.bf16.msra.mxu0 %v480
    %503 = vmatprep.subr.bf16.mxu0 0
    %504 = vmatpush1.bf16.msra.mxu0 %v481
    %505 = vmatprep.subr.bf16.mxu0 0
    %506 = vmatpush1.bf16.msra.mxu0 %v482
    %507 = vmatprep.subr.bf16.mxu0 0
    %508 = vmatpush1.bf16.msra.mxu0 0
    %509 = vmatprep.subr.bf16.mxu0 0
    %510 = vmatpush1.bf16.msra.mxu0 0
    %511 = vmatprep.subr.bf16.mxu0 0
    %512 = vmatpush1.bf16.msra.mxu0 0
    %513 = vmatprep.subr.bf16.mxu0 0
    %514 = vmatpush1.bf16.msra.mxu0 0
    %515 = vmatprep.subr.bf16.mxu0 0
    %516 = vmatpush1.bf16.msra.mxu0 0
    %517 = vmatprep.subr.bf16.mxu0 0
    %518 = vmatpush1.bf16.msra.mxu0 0
    %519 = vmatprep.subr.bf16.mxu0 0
    %520 = vmatpush1.bf16.msra.mxu0 0
    %521 = vmatprep.subr.bf16.mxu0 0
    %522 = vmatpush1.bf16.msra.mxu0 0
    %523 = vmatprep.mubr.bf16.mxu0 0
    %524 = vmatmul.mubr.bf16.gmra.mrb[0].mxu0 %v426
    %v525 = vpop.f32.mrb[0].mxu0
    %v526 = vadd.f32 %v188, %v525
    %v527 = vpop.f32.mrb[0].mxu0
    %v528 = vpop.f32.mrb[0].mxu0
    %v529 = vpop.f32.mrb[0].mxu0
    %530 = vdwg.mxu0
    %v531 = vld [vmem:[#allocation10] sm:$0x1]
    %v533 = vlaneseq
    %v534 = vshrl.u32 %v533, 7
    %v535 = vsub.s32 0, %v534
    %v536 = vrot.slane %v531, %v535
    %v538 = vadd.f32 %v526, %v536
    %v539 = vmax.f32 %v538, 0.0
    %v540 = vpack.c.bf16 %v539, %v539
    %v541 = vld [vmem:[%s9] sm:$0xf]
    %v542 = vld [vmem:[%s9 + $0x4] sm:$0xf]
    %v543 = vld [vmem:[%s9 + $0x8] sm:$0xf]
    %v544 = vld [vmem:[%s9 + $0xc] sm:$0xf]
    %v545 = vld [vmem:[%s9 + $0x10] sm:$0xf]
    %v546 = vld [vmem:[%s9 + $0x14] sm:$0xf]
    %v547 = vld [vmem:[%s9 + $0x18] sm:$0xf]
    %v548 = vld [vmem:[%s9 + $0x1c] sm:$0xf]
    %v549 = vld [vmem:[%s9 + $0x20] sm:$0xf]
    %v550 = vld [vmem:[%s9 + $0x24] sm:$0xf]
    %v551 = vld [vmem:[%s9 + $0x28] sm:$0xf]
    %v552 = vld [vmem:[%s9 + $0x2c] sm:$0xf]
    %v553 = vld [vmem:[%s9 + $0x30] sm:$0xf]
    %v554 = vld [vmem:[%s9 + $0x34] sm:$0xf]
    %v555 = vld [vmem:[%s9 + $0x38] sm:$0xf]
    %v556 = vld [vmem:[%s9 + $0x3c] sm:$0xf]
    %v557 = vld [vmem:[%s10] sm:$0x1]
    %v559 = vlaneseq
    %v560 = vshrl.u32 %v559, 7
    %v561 = vsub.s32 0, %v560
    %v562 = vrot.slane %v557, %v561
    %v580 = vunpack.c.l.b16 %v541
    %v581 = vunpack.c.l.b16 %v542
    %v582 = vunpack.c.l.b16 %v543
    %v583 = vunpack.c.l.b16 %v544
    %v584 = vunpack.c.l.b16 %v545
    %v585 = vunpack.c.l.b16 %v546
    %v586 = vunpack.c.l.b16 %v547
    %v587 = vunpack.c.l.b16 %v548
    %v588 = vunpack.c.l.b16 %v549
    %v589 = vunpack.c.l.b16 %v550
    %v590 = vunpack.c.l.b16 %v551
    %v591 = vunpack.c.l.b16 %v552
    %v592 = vunpack.c.l.b16 %v553
    %v593 = vunpack.c.l.b16 %v554
    %v594 = vunpack.c.l.b16 %v555
    %v595 = vunpack.c.l.b16 %v556
    %v596 = vpack.c.b16 %v581, %v580
    %v597 = vpack.c.b16 %v583, %v582
    %v598 = vpack.c.b16 %v585, %v584
    %v599 = vpack.c.b16 %v587, %v586
    %v600 = vpack.c.b16 %v589, %v588
    %v601 = vpack.c.b16 %v591, %v590
    %v602 = vpack.c.b16 %v593, %v592
    %v603 = vpack.c.b16 %v595, %v594
    %612 = vmatprep.subr.bf16.mxu0 0
    %613 = vmatpush1.bf16.msra.mxu0 %v596
    %614 = vmatprep.subr.bf16.mxu0 0
    %615 = vmatpush1.bf16.msra.mxu0 %v597
    %616 = vmatprep.subr.bf16.mxu0 0
    %617 = vmatpush1.bf16.msra.mxu0 %v598
    %618 = vmatprep.subr.bf16.mxu0 0
    %619 = vmatpush1.bf16.msra.mxu0 %v599
    %620 = vmatprep.subr.bf16.mxu0 0
    %621 = vmatpush1.bf16.msra.mxu0 %v600
    %622 = vmatprep.subr.bf16.mxu0 0
    %623 = vmatpush1.bf16.msra.mxu0 %v601
    %624 = vmatprep.subr.bf16.mxu0 0
    %625 = vmatpush1.bf16.msra.mxu0 %v602
    %626 = vmatprep.subr.bf16.mxu0 0
    %627 = vmatpush1.bf16.msra.mxu0 %v603
    %628 = vmatprep.subr.bf16.mxu0 0
    %629 = vmatpush1.bf16.msra.mxu0 0
    %630 = vmatprep.subr.bf16.mxu0 0
    %631 = vmatpush1.bf16.msra.mxu0 0
    %632 = vmatprep.subr.bf16.mxu0 0
    %633 = vmatpush1.bf16.msra.mxu0 0
    %634 = vmatprep.subr.bf16.mxu0 0
    %635 = vmatpush1.bf16.msra.mxu0 0
    %636 = vmatprep.subr.bf16.mxu0 0
    %637 = vmatpush1.bf16.msra.mxu0 0
    %638 = vmatprep.subr.bf16.mxu0 0
    %639 = vmatpush1.bf16.msra.mxu0 0
    %640 = vmatprep.subr.bf16.mxu0 0
    %641 = vmatpush1.bf16.msra.mxu0 0
    %642 = vmatprep.subr.bf16.mxu0 0
    %643 = vmatpush1.bf16.msra.mxu0 0
    %644 = vmatprep.mubr.bf16.mxu0 0
    %645 = vmatmul.mubr.bf16.gmra.mrb[0].mxu0 %v540
    %v646 = vpop.f32.mrb[0].mxu0
    %v647 = vadd.f32 %v562, %v646
    %v648 = vpop.f32.mrb[0].mxu0
    %v649 = vpop.f32.mrb[0].mxu0
    %v650 = vpop.f32.mrb[0].mxu0
    %651 = vdwg.mxu0
    %v652 = vmax.f32 %v647, 0.0
    %v653 = vpack.c.bf16 %v652, %v652
    %v654 = vld [vmem:[#allocation11] sm:$0xf]
    %v655 = vld [vmem:[#allocation11 + $0x4] sm:$0xf]
    %v656 = vld [vmem:[#allocation11 + $0x8] sm:$0xf]
    %v657 = vld [vmem:[#allocation11 + $0xc] sm:$0xf]
    %v658 = vld [vmem:[#allocation11 + $0x10] sm:$0xf]
    %v659 = vld [vmem:[#allocation11 + $0x14] sm:$0xf]
    %v660 = vld [vmem:[#allocation11 + $0x18] sm:$0xf]
    %v661 = vld [vmem:[#allocation11 + $0x1c] sm:$0xf]
    %v662 = vld [vmem:[%s12] sm:$0x1]
    %v664 = vlaneseq
    %v665 = vshrl.u32 %v664, 7
    %v666 = vsub.s32 0, %v665
    %v667 = vrot.slane %v662, %v666
    %v677 = vunpack.c.l.b16 %v654
    %v678 = vunpack.c.l.b16 %v655
    %v679 = vunpack.c.l.b16 %v656
    %v680 = vunpack.c.l.b16 %v657
    %v681 = vunpack.c.l.b16 %v658
    %v682 = vunpack.c.l.b16 %v659
    %v683 = vunpack.c.l.b16 %v660
    %v684 = vunpack.c.l.b16 %v661
    %v685 = vpack.c.b16 %v678, %v677
    %v686 = vpack.c.b16 %v680, %v679
    %v687 = vpack.c.b16 %v682, %v681
    %v688 = vpack.c.b16 %v684, %v683
    %vm693 = vcmask 523264
    %v695 = vsel %vm693, %v653, 0
    %697 = vmatprep.subr.bf16.mxu0 0
    %698 = vmatpush1.bf16.msra.mxu0 %v685
    %699 = vmatprep.subr.bf16.mxu0 0
    %700 = vmatpush1.bf16.msra.mxu0 %v686
    %701 = vmatprep.subr.bf16.mxu0 0
    %702 = vmatpush1.bf16.msra.mxu0 %v687
    %703 = vmatprep.subr.bf16.mxu0 0
    %704 = vmatpush1.bf16.msra.mxu0 %v688
    %705 = vmatprep.subr.bf16.mxu0 0
    %706 = vmatpush1.bf16.msra.mxu0 0
    %707 = vmatprep.subr.bf16.mxu0 0
    %708 = vmatpush1.bf16.msra.mxu0 0
    %709 = vmatprep.subr.bf16.mxu0 0
    %710 = vmatpush1.bf16.msra.mxu0 0
    %711 = vmatprep.subr.bf16.mxu0 0
    %712 = vmatpush1.bf16.msra.mxu0 0
    %713 = vmatprep.subr.bf16.mxu0 0
    %714 = vmatpush1.bf16.msra.mxu0 0
    %715 = vmatprep.subr.bf16.mxu0 0
    %716 = vmatpush1.bf16.msra.mxu0 0
    %717 = vmatprep.subr.bf16.mxu0 0
    %718 = vmatpush1.bf16.msra.mxu0 0
    %719 = vmatprep.subr.bf16.mxu0 0
    %720 = vmatpush1.bf16.msra.mxu0 0
    %721 = vmatprep.subr.bf16.mxu0 0
    %722 = vmatpush1.bf16.msra.mxu0 0
    %723 = vmatprep.subr.bf16.mxu0 0
    %724 = vmatpush1.bf16.msra.mxu0 0
    %725 = vmatprep.subr.bf16.mxu0 0
    %726 = vmatpush1.bf16.msra.mxu0 0
    %727 = vmatprep.subr.bf16.mxu0 0
    %728 = vmatpush1.bf16.msra.mxu0 0
    %729 = vmatprep.mubr.bf16.mxu0 0
    %730 = vmatmul.mubr.bf16.gmra.mrb[0].mxu0 %v695
    %v731 = vpop.f32.mrb[0].mxu0
    %v732 = vadd.f32 %v667, %v731
    %v733 = vpop.f32.mrb[0].mxu0
    %v734 = vpop.f32.mrb[0].mxu0
    %v735 = vpop.f32.mrb[0].mxu0
    %736 = vdwg.mxu0
    %v737 = vadd.f32 %v421, %v732
    %v738 = vpack.c.bf16 %v737, %v737
    %739 = vst [vmem:[#allocation13] sm:$0xf] %v738
    // Predicated region
    $region78: #{tpu_custom_call.1} parent=1 // pred_check
      _
    $region79: #{tpu_custom_call.1} parent=1 // pred_check_branch
      %741 = sbr.rel (0) target = $region81
    $region80: #{tpu_custom_call.1} parent=1 // pred_region
      %s743 = ssub.s32 64, 64
      %744 = vsyncadd [#allocation4], %s743
      %s746 = sshll.u32 [#allocation13], 4
      %s747 = int_to_ptr.vmem [resolvable:$true] %s746
      %749 = dma.vmem_to_hbm [thread:$0]  %s747, 64, %s13, [#allocation4]
    $region81: #{tpu_custom_call.1} parent=1 // pred_fallthru
      _
    // Predicated region
    $region82: #{tpu_custom_call.1} parent=1 // pred_check
      _
    $region83: #{tpu_custom_call.1} parent=1 // pred_check_branch
      %751 = sbr.rel (0) target = $region85
    $region84: #{tpu_custom_call.1} parent=1 // pred_region
      %752 = dma.done [#allocation4], 64
    $region85: #{tpu_custom_call.1} parent=1 // pred_fallthru
      _
    %753 = vsyncpa [#allocation3], 1
    %754 = vsyncpa [#allocation6], 1
    %755 = vsyncpa [#allocation9], 1
    %756 = vsyncpa [#allocation12], 1
    %757 = vsyncpa [#allocation4], 1

</llo_original>
